<compile_context>
chip_gen: v7x
topology: tpu7x:2x2x1
jax: 0.10.0
libtpu: 0.0.40
codegen_flags: <defaults>
</compile_context>

<pallas_src>
import functools

import jax
import jax.numpy as jnp
from jax.experimental import pallas as pl
from jax.experimental.pallas import tpu as pltpu

LANES = 128                       # vreg lane width
DEFAULT_TILE_ROWS = 4096          # (4096, 128) f32 block = 2 MiB
MAX_TILE_ROWS = 8192              # 4 MiB block -> 16 MiB pipelined (in+out), v7x-safe
_VMEM_LIMIT_BYTES = 32 * 1024 * 1024


def mlp_kernel(params_ref, x_ref, o_ref):
    # params_ref: SMEM (7,) f32 = [w1_00, w1_01, b1_0, b1_1, w2_00, w2_10, b2_00]
    # x_ref / o_ref: (tile, 128) VMEM tiles of the lane-dense batch view.
    x = x_ref[...].astype(jnp.float32)      # f32 compute (v5e has no bf16 VALU)
    w1_0 = params_ref[0]
    w1_1 = params_ref[1]
    b1_0 = params_ref[2]
    b1_1 = params_ref[3]
    w2_0 = params_ref[4]
    w2_1 = params_ref[5]
    b2 = params_ref[6]

    h0 = jnp.maximum(x * w1_0 + b1_0, 0.0)   # ReLU(fc1) unit 0
    h1 = jnp.maximum(x * w1_1 + b1_1, 0.0)   # ReLU(fc1) unit 1
    y = h0 * w2_0 + h1 * w2_1 + b2           # fc2
    o_ref[...] = y.astype(o_ref.dtype)


def _pack_params(w1, b1, w2, b2):
    return jnp.concatenate(
        [w1.reshape(-1), b1.reshape(-1), w2.reshape(-1), b2.reshape(-1)]
    ).astype(jnp.float32)


def _pointwise_mlp(x_flat, params, out_dtype):
    # Tiny (<128 element) tail path: plain jnp, fuses with neighbouring ops.
    xf = x_flat.astype(jnp.float32)
    h0 = jnp.maximum(xf * params[0] + params[2], 0.0)
    h1 = jnp.maximum(xf * params[1] + params[3], 0.0)
    return (h0 * params[4] + h1 * params[5] + params[6]).astype(out_dtype)


def _choose_tile(n_rows, tile_rows):
    """Block height: multiple of 8 (or the full array dim), >=2 grid steps when
    possible (v7x megacore), capped by tile_rows for VMEM."""
    if n_rows <= 16:
        return n_rows                                  # one block == full array dim
    half = ((pl.cdiv(n_rows, 2) + 7) // 8) * 8         # gives >= 2 grid steps
    return max(8, min(tile_rows, half))


@functools.partial(jax.jit, static_argnames=("tile_rows",))
def net_forward(x, w1, b1, w2, b2, *, tile_rows=DEFAULT_TILE_ROWS):
    """Forward pass of Net for x of shape (N, 1); returns (N, 1)."""
    N = x.shape[0]
    dtype = x.dtype
    params = _pack_params(w1, b1, w2, b2)

    # Robustness: tile_rows must be a multiple of 8 and capped for VMEM.
    tile_rows = max(8, (min(int(tile_rows), MAX_TILE_ROWS) // 8) * 8)

    xf = x.reshape(-1)
    n_rows = N // LANES                  # number of full 128-wide rows
    n_aligned = n_rows * LANES
    tail = N - n_aligned

    outs = []
    if n_rows > 0:
        # Zero-copy reshape when N is lane-aligned; otherwise slice the prefix.
        x2d = (xf if tail == 0 else xf[:n_aligned]).reshape(n_rows, LANES)
        tile = _choose_tile(n_rows, tile_rows)
        grid = (pl.cdiv(n_rows, tile),)   # partial last block masked by Pallas

        out2d = pl.pallas_call(
            mlp_kernel,
            out_shape=jax.ShapeDtypeStruct((n_rows, LANES), dtype),
            grid_spec=pltpu.PrefetchScalarGridSpec(
                num_scalar_prefetch=1,                       # params -> SMEM
                grid=grid,
                in_specs=[pl.BlockSpec((tile, LANES), lambda i, p: (i, 0))],
                out_specs=pl.BlockSpec((tile, LANES), lambda i, p: (i, 0)),
            ),
            compiler_params=pltpu.CompilerParams(
                dimension_semantics=("parallel",),
                vmem_limit_bytes=_VMEM_LIMIT_BYTES,
            ),
        )(params, x2d)
        outs.append(out2d.reshape(-1))

    if tail > 0:
        outs.append(_pointwise_mlp(xf[n_aligned:], params, dtype))

    y = outs[0] if len(outs) == 1 else jnp.concatenate(outs)
    return y.reshape(N, 1)


def init_params(key):
    # Deterministic init mimicking nn.Linear's uniform(-1/sqrt(fan_in), 1/sqrt(fan_in)).
    k1, k2, k3, k4 = jax.random.split(key, 4)
    bound1 = 1.0  # fan_in = 1
    w1 = jax.random.uniform(k1, (1, 2), jnp.float32, -bound1, bound1)   # (in=1, out=2)
    b1 = jax.random.uniform(k2, (1, 2), jnp.float32, -bound1, bound1)
    bound2 = float(1.0 / jnp.sqrt(2.0))  # fan_in = 2
    w2 = jax.random.uniform(k3, (2, 1), jnp.float32, -bound2, bound2)   # (in=2, out=1)
    b2 = jax.random.uniform(k4, (1, 1), jnp.float32, -bound2, bound2)
    return w1, b1, w2, b2


def _reference(x, w1, b1, w2, b2):
    return jnp.maximum(x @ w1 + b1, 0.0) @ w2 + b2


if __name__ == "__main__":
    key = jax.random.PRNGKey(0)
    k_x1, k_x2, k_p = jax.random.split(key, 3)
    w1, b1, w2, b2 = init_params(k_p)

    # Lane-aligned small batch: fully zero-copy path, single block.
    N1 = 1024
    x1 = jax.random.normal(k_x1, (N1, 1), jnp.float32)
    out1 = jax.block_until_ready(net_forward(x1, w1, b1, w2, b2))
    ref1 = _reference(x1, w1, b1, w2, b2)
    assert out1.shape == (N1, 1)
    assert jnp.allclose(out1, ref1, atol=1e-5, rtol=1e-5)

    # Misaligned batch: multiple grid steps, partial last block, <128-elem tail.
    N2 = 5000  # 39 full rows of 128 + tail of 8
    x2 = jax.random.normal(k_x2, (N2, 1), jnp.float32)
    out2 = jax.block_until_ready(net_forward(x2, w1, b1, w2, b2, tile_rows=16))
    ref2 = _reference(x2, w1, b1, w2, b2)
    assert out2.shape == (N2, 1)
    assert jnp.allclose(out2, ref2, atol=1e-5, rtol=1e-5)

    # bf16 I/O path: halves HBM traffic; compute stays f32 in-kernel.
    x3 = x1.astype(jnp.bfloat16)
    out3 = jax.block_until_ready(net_forward(x3, w1, b1, w2, b2))
    ref3 = _reference(x3.astype(jnp.float32), w1, b1, w2, b2)
    assert out3.dtype == jnp.bfloat16
    assert jnp.allclose(out3.astype(jnp.float32), ref3, atol=3e-2, rtol=3e-2)

    print("KERNEL_OK")
</pallas_src>

<mosaic_0001>
module attributes {stable_mosaic.version = 11 : i64} {
  func.func @mlp_kernel(%arg0: i32, %arg1: memref<7xf32, #tpu.memory_space<smem>>, %arg2: memref<8x128xf32, #tpu.memory_space<vmem>>, %arg3: memref<8x128xf32, #tpu.memory_space<vmem>>) attributes {dimension_semantics = [#tpu.dimension_semantics<parallel>], iteration_bounds = array<i64: 1>, scalar_prefetch = 1 : i64, scratch_operands = 0 : i64, tpu.core_type = #tpu.core_type<tc>, window_params = [{transform_indices = @transform_0, window_bounds = array<i64: 8, 128>}, {transform_indices = @transform_1, window_bounds = array<i64: 8, 128>}]} {
    %c0 = arith.constant 0 : index
    %c0_0 = arith.constant 0 : index
    %0 = vector.load %arg2[%c0, %c0_0] : memref<8x128xf32, #tpu.memory_space<vmem>>, vector<8x128xf32>
    %c0_1 = arith.constant 0 : index
    %1 = memref.load %arg1[%c0_1] : memref<7xf32, #tpu.memory_space<smem>>
    %c1 = arith.constant 1 : index
    %2 = memref.load %arg1[%c1] : memref<7xf32, #tpu.memory_space<smem>>
    %c2 = arith.constant 2 : index
    %3 = memref.load %arg1[%c2] : memref<7xf32, #tpu.memory_space<smem>>
    %c3 = arith.constant 3 : index
    %4 = memref.load %arg1[%c3] : memref<7xf32, #tpu.memory_space<smem>>
    %c4 = arith.constant 4 : index
    %5 = memref.load %arg1[%c4] : memref<7xf32, #tpu.memory_space<smem>>
    %c5 = arith.constant 5 : index
    %6 = memref.load %arg1[%c5] : memref<7xf32, #tpu.memory_space<smem>>
    %c6 = arith.constant 6 : index
    %7 = memref.load %arg1[%c6] : memref<7xf32, #tpu.memory_space<smem>>
    %8 = vector.broadcast %1 : f32 to vector<8x128xf32>
    %9 = arith.mulf %0, %8 : vector<8x128xf32>
    %10 = vector.broadcast %3 : f32 to vector<8x128xf32>
    %11 = arith.addf %9, %10 : vector<8x128xf32>
    %cst = arith.constant 0.000000e+00 : f32
    %12 = vector.broadcast %cst : f32 to vector<8x128xf32>
    %13 = arith.maximumf %11, %12 : vector<8x128xf32>
    %14 = vector.broadcast %2 : f32 to vector<8x128xf32>
    %15 = arith.mulf %0, %14 : vector<8x128xf32>
    %16 = vector.broadcast %4 : f32 to vector<8x128xf32>
    %17 = arith.addf %15, %16 : vector<8x128xf32>
    %cst_2 = arith.constant 0.000000e+00 : f32
    %18 = vector.broadcast %cst_2 : f32 to vector<8x128xf32>
    %19 = arith.maximumf %17, %18 : vector<8x128xf32>
    %20 = vector.broadcast %5 : f32 to vector<8x128xf32>
    %21 = arith.mulf %13, %20 : vector<8x128xf32>
    %22 = vector.broadcast %6 : f32 to vector<8x128xf32>
    %23 = arith.mulf %19, %22 : vector<8x128xf32>
    %24 = arith.addf %21, %23 : vector<8x128xf32>
    %25 = vector.broadcast %7 : f32 to vector<8x128xf32>
    %26 = arith.addf %24, %25 : vector<8x128xf32>
    %c0_3 = arith.constant 0 : index
    %c0_4 = arith.constant 0 : index
    %27 = vector.load %arg3[%c0_3, %c0_4] : memref<8x128xf32, #tpu.memory_space<vmem>>, vector<8x128xf32>
    tpu.vector_store %arg3[%c0_3, %c0_4], %26 {strides = array<i32>} : memref<8x128xf32, #tpu.memory_space<vmem>>, vector<8x128xf32>,
    return
  }
  func.func @transform_0(%arg0: i32, %arg1: memref<7xf32, #tpu.memory_space<smem>>) -> (i32, i32) {
    %c0_i32 = arith.constant 0 : i32
    %c0_i32_0 = arith.constant 0 : i32
    return %arg0, %c0_i32 : i32, i32
  }
  func.func @transform_1(%arg0: i32, %arg1: memref<7xf32, #tpu.memory_space<smem>>) -> (i32, i32) {
    %c0_i32 = arith.constant 0 : i32
    %c0_i32_0 = arith.constant 0 : i32
    return %arg0, %c0_i32 : i32, i32
  }
}

</mosaic_0001>

<llo_original>
// kernel: net_forward.1
$region0: #{net_forward.1}
  #allocation0 [shape = 'u32[]', space=smem, size = 0x4, offset = 0x4, fixed_abs, tag = 'smem constant byte address 0x4 - core index']
  #allocation1 [shape = 'u32[144,128]{1,0:T(1,128)}', space=vmem, size = 0x12000, scoped, tag = 'internal scratch']
  #allocation2 [shape = 's32[1]{0}', space=sflag, size = 0x4, scoped, tag = 'scoped memory for net_forward.1']
  #allocation3 [shape = 'u8[512]{0}', space=smem, size = 0x200, scoped, tag = 'prefetched SMEM operand 0']
  %s0 = inlined_call_operand.vmem [shape: f32[7], index: 0, kind: input, shape index: {}]
  %s1 = inlined_call_operand.vmem [shape: f32[8,128], index: 1, kind: input, shape index: {}]
  %s2 = inlined_call_operand.hbm [shape: f32[8,128], index: 2, kind: output, shape index: {}]
  %s3 = sld [smem:[#allocation0]]
  $region14: #{net_forward.1} parent=0
    _
  %s5 = ssub.s32 1, %s3
  %s6 = scalar_select 0, %s5, %s3
  %s7 = sshll.u32 %s0, 4
  %s8 = int_to_ptr.vmem [resolvable:$true] %s7
  %10 = dma.vmem_to_smem %s8, 16, [#allocation3], [#allocation2]
  %11 = dma.done [#allocation2], 16
  %12 = sfence
  $region1: #{net_forward.1} parent=0
    #allocation4 [shape = 'u8[4096]{0}', space=vmem, size = 0x1000, scoped, tag = 'output window, operand 0, single buffered']
    #allocation5 [shape = 's32[1]{0}', space=sflag, size = 0x4, scoped, tag = 'scoped memory for net_forward.1']
    %13 = vsyncpa [#allocation5], 0
    // Predicated region
    $region2: #{net_forward.1} parent=1 // pred_check
      _
    $region3: #{net_forward.1} parent=1 // pred_check_branch
      %15 = sbr.rel (0) target = $region5
    $region4: #{net_forward.1} parent=1 // pred_region
      _
    $region5: #{net_forward.1} parent=1 // pred_fallthru
      _
    %v16 = vld [vmem:[%s1] sm:$0xff]
    %s17 = sld [smem:[#allocation3]]
    %s18 = sld [smem:[#allocation3 + $0x1]]
    %s19 = sld [smem:[#allocation3 + $0x2]]
    %s20 = sld [smem:[#allocation3 + $0x3]]
    %s21 = sld [smem:[#allocation3 + $0x4]]
    %s22 = sld [smem:[#allocation3 + $0x5]]
    %s23 = sld [smem:[#allocation3 + $0x6]]
    %v24 = vstv %s17
    %v25 = vmul.f32 %v16, %v24
    %v26 = vstv %s19
    %v27 = vadd.f32 %v25, %v26
    %v28 = vmax.f32 %v27, 0.0
    %v29 = vstv %s18
    %v30 = vmul.f32 %v16, %v29
    %v31 = vstv %s20
    %v32 = vadd.f32 %v30, %v31
    %v33 = vmax.f32 %v32, 0.0
    %v34 = vstv %s21
    %v35 = vmul.f32 %v28, %v34
    %v36 = vstv %s22
    %v37 = vmul.f32 %v33, %v36
    %v38 = vadd.f32 %v35, %v37
    %v39 = vstv %s23
    %v40 = vadd.f32 %v38, %v39
    %41 = vst [vmem:[#allocation4] sm:$0xff] %v40
    // Predicated region
    $region6: #{net_forward.1} parent=1 // pred_check
      _
    $region7: #{net_forward.1} parent=1 // pred_check_branch
      %43 = sbr.rel (0) target = $region9
    $region8: #{net_forward.1} parent=1 // pred_region
      %s45 = ssub.s32 128, 128
      %46 = vsyncadd [#allocation5], %s45
      %s48 = sshll.u32 [#allocation4], 4
      %s49 = int_to_ptr.vmem [resolvable:$true] %s48
      %51 = dma.vmem_to_hbm [thread:$0]  %s49, 128, %s2, [#allocation5]
    $region9: #{net_forward.1} parent=1 // pred_fallthru
      _
    // Predicated region
    $region10: #{net_forward.1} parent=1 // pred_check
      _
    $region11: #{net_forward.1} parent=1 // pred_check_branch
      %53 = sbr.rel (0) target = $region13
    $region12: #{net_forward.1} parent=1 // pred_region
      %54 = dma.done [#allocation5], 128
    $region13: #{net_forward.1} parent=1 // pred_fallthru
      _
    %55 = vsyncpa [#allocation5], 1

</llo_original>
